<compile_context>
chip_gen: v6e
topology: v6e:2x2x1
jax: 0.10.0
libtpu: 0.0.40
codegen_flags: <defaults>
</compile_context>

<pallas_src>
import numpy as np
import jax
import jax.numpy as jnp
from jax.experimental import pallas as pl
from jax.experimental.pallas import tpu as pltpu


# ----------------------------------------------------------------------------
# Plain-NumPy circuit constant builders (parameter setup glue, not hot path)
# ----------------------------------------------------------------------------
def _kron_on_wire(U2, wire, n_wires):
    M = np.array([[1.0 + 0j]])
    I2 = np.eye(2)
    for w in range(n_wires):
        M = np.kron(M, U2 if w == wire else I2)
    return M


def _cnot(control, target, n_wires):
    I2 = np.eye(2)
    P0 = np.diag([1.0, 0.0]).astype(complex)
    P1 = np.diag([0.0, 1.0]).astype(complex)
    X = np.array([[0.0, 1.0], [1.0, 0.0]], dtype=complex)
    M0 = np.array([[1.0 + 0j]])
    M1 = np.array([[1.0 + 0j]])
    for w in range(n_wires):
        M0 = np.kron(M0, P0 if w == control else I2)
        M1 = np.kron(M1, P1 if w == control else (X if w == target else I2))
    return M0 + M1


def _rx(theta):
    c, s = np.cos(theta / 2.0), np.sin(theta / 2.0)
    return np.array([[c, -1j * s], [-1j * s, c]], dtype=complex)


def _ry(theta):
    c, s = np.cos(theta / 2.0), np.sin(theta / 2.0)
    return np.array([[c, -s], [s, c]], dtype=complex)


def _basic_entangler_layer(param_row, n_wires):
    """One BasicEntanglerLayers layer: RX on every wire, then a CNOT ring."""
    D = 2 ** n_wires
    U = np.eye(D, dtype=complex)
    for j in range(n_wires):
        U = _kron_on_wire(_rx(param_row[j]), j, n_wires) @ U
    if n_wires == 2:
        pairs = [(0, 1)]
    elif n_wires > 2:
        pairs = [(j, (j + 1) % n_wires) for j in range(n_wires)]
    else:
        pairs = []
    for a, b in pairs:
        U = _cnot(a, b, n_wires) @ U
    return U


def _round_up(v, m):
    return ((v + m - 1) // m) * m


def build_circuit_constants(weights, n_wires, kernel_size, n_layers):
    """Returns (psi0 stacked column (2D,1), packed constants block (R, 2D)).

    Packed layout (rows):
      [0            : K*2D )  -> K block-diag generators G2_j = kron(I2, -iY_j)
      [K*2D         : (K+1)*2D)  -> W = [[Ur, -Ui], [Ui, Ur]]  (U_post, realified)
      [(K+1)*2D     : ... )   -> ZZ = [Z | Z] padded up to a multiple of 8 rows
    """
    w = np.asarray(weights, dtype=np.float64)
    D = 2 ** n_wires
    D2 = 2 * D
    K = kernel_size

    U0 = _basic_entangler_layer(w[0], n_wires)
    psi0 = U0[:, 0]                                  # U_pre |0...0>

    U_post = np.eye(D, dtype=complex)
    for i in range(1, n_layers + 1):
        U_post = _basic_entangler_layer(w[i], n_wires) @ U_post

    m_iY = np.array([[0.0, -1.0], [1.0, 0.0]], dtype=complex)   # -i * PauliY
    g_blocks = []
    for j in range(K):
        G = _kron_on_wire(m_iY, j, n_wires).real                # (D, D), real
        G2 = np.zeros((D2, D2))
        G2[:D, :D] = G
        G2[D:, D:] = G
        g_blocks.append(G2)

    Ur, Ui = U_post.real, U_post.imag
    Wbig = np.block([[Ur, -Ui], [Ui, Ur]])                      # (2D, 2D)

    Zs = np.zeros((n_wires, D))
    for c in range(n_wires):
        for s in range(D):
            bit = (s >> (n_wires - 1 - c)) & 1                  # wire 0 = MSB
            Zs[c, s] = 1.0 if bit == 0 else -1.0
    zrows = _round_up(n_wires, 8)
    ZZ = np.zeros((zrows, D2))
    ZZ[:n_wires, :D] = Zs
    ZZ[:n_wires, D:] = Zs

    consts = np.concatenate(g_blocks + [Wbig, ZZ], axis=0).astype(np.float32)
    p0 = np.concatenate([psi0.real, psi0.imag]).reshape(D2, 1).astype(np.float32)
    return jnp.asarray(p0), jnp.asarray(consts)


# ----------------------------------------------------------------------------
# Pallas kernel: stacked-state RY upload + fused U_post matmul + Z expectations
# ----------------------------------------------------------------------------
def quanv_kernel(x_ref, p0_ref, c_ref, out_ref):
    # x_ref: (K, TP) angles;  p0_ref: (2D, 1) stacked [Re psi0; Im psi0]
    # c_ref: packed constants (K*2D + 2D + pad, 2D);  out_ref: (C, TP)
    K, TP = x_ref.shape
    D2 = p0_ref.shape[0]
    C = out_ref.shape[0]

    # cos/sin once over the whole angle block (2 EUP passes, not 2K).
    half = x_ref[...] * 0.5
    cos_all = jnp.cos(half)                           # (K, TP)
    sin_all = jnp.sin(half)

    # Stacked real/imag state, broadcast over patch lanes.
    state = jnp.broadcast_to(p0_ref[...], (D2, TP))   # (2D, TP)

    # RY(theta) = cos(theta/2) I + sin(theta/2) (-iY); gates on distinct wires
    # commute -> apply sequentially (static unroll, K small).  One fused
    # block-diagonal (2D,2D) matmul per wire handles real+imag halves at once.
    for j in range(K):
        g2 = c_ref[pl.ds(j * D2, D2), :]              # (2D, 2D), static slice
        g = jnp.dot(g2, state, preferred_element_type=jnp.float32)
        cj = cos_all[j:j + 1, :]                      # (1, TP)
        sj = sin_all[j:j + 1, :]
        state = cj * state + sj * g

    # Fused complex U_post: [fr; fi] = [[Ur,-Ui],[Ui,Ur]] @ [psr; psi]
    wbig = c_ref[pl.ds(K * D2, D2), :]                # (2D, 2D)
    f = jnp.dot(wbig, state, preferred_element_type=jnp.float32)
    sq = f * f                                        # [fr^2 ; fi^2]

    # out[c] = sum_s Z[c,s] (fr[s]^2 + fi[s]^2) = [Z | Z] @ sq
    zz = c_ref[pl.ds((K + 1) * D2, C), :]             # (C, 2D)
    out_ref[...] = jnp.dot(zz, sq, preferred_element_type=jnp.float32)


# ----------------------------------------------------------------------------
# Wrapper: mean-over-channels, pad, im2col, pallas_call, reshape back
# ----------------------------------------------------------------------------
def quanv1d_forward(x, weights, *, out_channels, kernel_size, n_layers,
                    padding=1, stride=1, max_tp=512):
    bs, ch, l = x.shape
    xm = x.mean(axis=1) if ch > 1 else x[:, 0, :]                  # (bs, l)
    xp = jnp.pad(xm, ((0, 0), (padding, padding)))                 # (bs, l+2p)
    l_out = (l + 2 * padding - kernel_size) // stride + 1

    # Reference iterates k in range(0, l_out, stride); window start = k,
    # output column = k // stride.
    ks = np.arange(0, l_out, stride)
    idx = ks[:, None] + np.arange(kernel_size)[None, :]            # (n_k, K)
    windows = xp[:, idx]                                           # (bs, n_k, K)
    n_k = len(ks)
    P = bs * n_k
    angles = windows.reshape(P, kernel_size).T.astype(jnp.float32)  # (K, P)

    # Wide lane tile (multiple of 128, up to max_tp) amortizes per-step
    # pipeline overhead and keeps output stores lane-dense.
    TP = min(max_tp, _round_up(P, 128))
    P_pad = _round_up(P, TP)
    angles = jnp.pad(angles, ((0, 0), (0, P_pad - P)))             # RY(0) = I

    p0, consts = build_circuit_constants(weights, out_channels,
                                         kernel_size, n_layers)
    D2 = 2 * (2 ** out_channels)
    R = consts.shape[0]

    out_flat = pl.pallas_call(
        quanv_kernel,
        out_shape=jax.ShapeDtypeStruct((out_channels, P_pad), jnp.float32),
        grid_spec=pltpu.PrefetchScalarGridSpec(
            num_scalar_prefetch=0,
            grid=(P_pad // TP,),
            in_specs=[
                pl.BlockSpec((kernel_size, TP), lambda p: (0, p)),
                pl.BlockSpec((D2, 1), lambda p: (0, 0)),
                pl.BlockSpec((R, D2), lambda p: (0, 0)),
            ],
            out_specs=pl.BlockSpec((out_channels, TP), lambda p: (0, p)),
        ),
        compiler_params=pltpu.CompilerParams(dimension_semantics=("parallel",)),
    )(angles, p0, consts)

    out_flat = out_flat[:, :P].reshape(out_channels, bs, n_k)      # (C, bs, n_k)
    if stride == 1:
        # n_k == l_out: direct transpose, no zero-fill + scatter round trip.
        return jnp.transpose(out_flat, (1, 0, 2))
    result = jnp.zeros((bs, out_channels, l_out), jnp.float32)
    return result.at[:, :, ks // stride].set(jnp.transpose(out_flat, (1, 0, 2)))


# ----------------------------------------------------------------------------
# Pure NumPy reference (statevector simulation, gate by gate) for validation
# ----------------------------------------------------------------------------
def ref_forward(x, weights, *, out_channels, kernel_size, n_layers,
                padding=1, stride=1):
    x = np.asarray(x, np.float64)
    weights = np.asarray(weights, np.float64)
    bs, ch, l = x.shape
    n = out_channels
    D = 2 ** n
    xm = x.mean(axis=1) if ch > 1 else x[:, 0, :]
    xp = np.pad(xm, ((0, 0), (padding, padding)))
    l_out = (l + 2 * padding - kernel_size) // stride + 1

    U0 = _basic_entangler_layer(weights[0], n)
    layers = [_basic_entangler_layer(weights[i], n) for i in range(1, n_layers + 1)]
    Zsigns = np.zeros((n, D))
    for c in range(n):
        for s in range(D):
            Zsigns[c, s] = 1.0 if ((s >> (n - 1 - c)) & 1) == 0 else -1.0

    out = np.zeros((bs, out_channels, l_out), np.float32)
    for b in range(bs):
        for k in range(0, l_out, stride):
            inp = xp[b, k:k + kernel_size]
            psi = U0[:, 0].copy()
            for j in range(kernel_size):
                psi = _kron_on_wire(_ry(inp[j]), j, n) @ psi
            for U in layers:
                psi = U @ psi
            probs = np.abs(psi) ** 2
            out[b, :, k // stride] = (Zsigns @ probs).astype(np.float32)
    return out


if __name__ == "__main__":
    out_channels, kernel_size, n_layers = 4, 3, 2

    def run_case(key, bs, ch, l, padding, stride):
        k_x, k_w = jax.random.split(key)
        x = jax.random.normal(k_x, (bs, ch, l), dtype=jnp.float32)
        # TorchLayer default init: uniform(0, 2*pi); shape [n_layers+1, out_channels]
        weights = jax.random.uniform(k_w, (n_layers + 1, out_channels),
                                     minval=0.0, maxval=2.0 * np.pi,
                                     dtype=jnp.float32)
        out = quanv1d_forward(x, weights, out_channels=out_channels,
                              kernel_size=kernel_size, n_layers=n_layers,
                              padding=padding, stride=stride)
        out = jax.block_until_ready(out)
        l_out = (l + 2 * padding - kernel_size) // stride + 1
        assert out.shape == (bs, out_channels, l_out), out.shape
        ref = ref_forward(np.asarray(x), np.asarray(weights),
                          out_channels=out_channels, kernel_size=kernel_size,
                          n_layers=n_layers, padding=padding, stride=stride)
        np.testing.assert_allclose(np.asarray(out), ref, atol=2e-3, rtol=1e-3)

    key = jax.random.PRNGKey(0)
    keys = jax.random.split(key, 3)
    # 1) module-default toy shape (bs=2, ch=4, l=16)
    run_case(keys[0], bs=2, ch=4, l=16, padding=1, stride=1)
    # 2) larger problem: exercises TP=512 tile and a multi-step grid
    run_case(keys[1], bs=4, ch=2, l=300, padding=1, stride=1)
    # 3) stride > 1: exercises the scatter output path
    run_case(keys[2], bs=2, ch=1, l=20, padding=1, stride=2)

    print("KERNEL_OK")
</pallas_src>

<mosaic_0001>
module attributes {stable_mosaic.version = 11 : i64} {
  func.func @quanv_kernel(%arg0: i32, %arg1: memref<3x128xf32, #tpu.memory_space<vmem>>, %arg2: memref<32x1xf32, #tpu.memory_space<vmem>>, %arg3: memref<136x32xf32, #tpu.memory_space<vmem>>, %arg4: memref<4x128xf32, #tpu.memory_space<vmem>>) attributes {dimension_semantics = [#tpu.dimension_semantics<parallel>], iteration_bounds = array<i64: 1>, scalar_prefetch = 0 : i64, scratch_operands = 0 : i64, tpu.core_type = #tpu.core_type<tc>, window_params = [{transform_indices = @transform_0, window_bounds = array<i64: 3, 128>}, {pipeline_mode = #tpu.pipeline_mode<synchronous>, transform_indices = @transform_1, window_bounds = array<i64: 32, 1>}, {pipeline_mode = #tpu.pipeline_mode<synchronous>, transform_indices = @transform_2, window_bounds = array<i64: 136, 32>}, {transform_indices = @transform_3, window_bounds = array<i64: 4, 128>}]} {
    %c0 = arith.constant 0 : index
    %c0_0 = arith.constant 0 : index
    %0 = vector.load %arg1[%c0, %c0_0] : memref<3x128xf32, #tpu.memory_space<vmem>>, vector<3x128xf32>
    %cst = arith.constant 5.000000e-01 : f32
    %1 = vector.broadcast %cst : f32 to vector<3x128xf32>
    %2 = arith.mulf %0, %1 : vector<3x128xf32>
    %3 = math.cos %2 : vector<3x128xf32>
    %4 = math.sin %2 : vector<3x128xf32>
    %c0_1 = arith.constant 0 : index
    %c0_2 = arith.constant 0 : index
    %5 = vector.load %arg2[%c0_1, %c0_2] : memref<32x1xf32, #tpu.memory_space<vmem>>, vector<32x1xf32>
    %6 = vector.shape_cast %5 : vector<32x1xf32> to vector<32x1xf32>
    %7 = vector.broadcast %6 : vector<32x1xf32> to vector<32x128xf32>
    %c0_3 = arith.constant 0 : index
    %c0_4 = arith.constant 0 : index
    %8 = vector.load %arg3[%c0_3, %c0_4] : memref<136x32xf32, #tpu.memory_space<vmem>>, vector<32x32xf32>
    %cst_5 = arith.constant dense<0.000000e+00> : vector<32x128xf32>
    %9 = tpu.matmul %8, %7, %cst_5 {dimension_numbers = #tpu.dot_dimension_numbers<[1], [0], [0], [1], [0, 0, 1, 1], [], []>} : vector<32x32xf32>, vector<32x128xf32>, vector<32x128xf32> -> vector<32x128xf32>
    %10 = vector.extract_strided_slice %3 {offsets = [0, 0], sizes = [1, 128], strides = [1, 1]} : vector<3x128xf32> to vector<1x128xf32>
    %11 = vector.extract_strided_slice %4 {offsets = [0, 0], sizes = [1, 128], strides = [1, 1]} : vector<3x128xf32> to vector<1x128xf32>
    %12 = vector.broadcast %10 : vector<1x128xf32> to vector<32x128xf32>
    %13 = arith.mulf %12, %7 : vector<32x128xf32>
    %14 = vector.broadcast %11 : vector<1x128xf32> to vector<32x128xf32>
    %15 = arith.mulf %14, %9 : vector<32x128xf32>
    %16 = arith.addf %13, %15 : vector<32x128xf32>
    %c32 = arith.constant 32 : index
    %c0_6 = arith.constant 0 : index
    %17 = vector.load %arg3[%c32, %c0_6] : memref<136x32xf32, #tpu.memory_space<vmem>>, vector<32x32xf32>
    %cst_7 = arith.constant dense<0.000000e+00> : vector<32x128xf32>
    %18 = tpu.matmul %17, %16, %cst_7 {dimension_numbers = #tpu.dot_dimension_numbers<[1], [0], [0], [1], [0, 0, 1, 1], [], []>} : vector<32x32xf32>, vector<32x128xf32>, vector<32x128xf32> -> vector<32x128xf32>
    %19 = vector.extract_strided_slice %3 {offsets = [1, 0], sizes = [1, 128], strides = [1, 1]} : vector<3x128xf32> to vector<1x128xf32>
    %20 = vector.extract_strided_slice %4 {offsets = [1, 0], sizes = [1, 128], strides = [1, 1]} : vector<3x128xf32> to vector<1x128xf32>
    %21 = vector.broadcast %19 : vector<1x128xf32> to vector<32x128xf32>
    %22 = arith.mulf %21, %16 : vector<32x128xf32>
    %23 = vector.broadcast %20 : vector<1x128xf32> to vector<32x128xf32>
    %24 = arith.mulf %23, %18 : vector<32x128xf32>
    %25 = arith.addf %22, %24 : vector<32x128xf32>
    %c64 = arith.constant 64 : index
    %c0_8 = arith.constant 0 : index
    %26 = vector.load %arg3[%c64, %c0_8] : memref<136x32xf32, #tpu.memory_space<vmem>>, vector<32x32xf32>
    %cst_9 = arith.constant dense<0.000000e+00> : vector<32x128xf32>
    %27 = tpu.matmul %26, %25, %cst_9 {dimension_numbers = #tpu.dot_dimension_numbers<[1], [0], [0], [1], [0, 0, 1, 1], [], []>} : vector<32x32xf32>, vector<32x128xf32>, vector<32x128xf32> -> vector<32x128xf32>
    %28 = vector.extract_strided_slice %3 {offsets = [2, 0], sizes = [1, 128], strides = [1, 1]} : vector<3x128xf32> to vector<1x128xf32>
    %29 = vector.extract_strided_slice %4 {offsets = [2, 0], sizes = [1, 128], strides = [1, 1]} : vector<3x128xf32> to vector<1x128xf32>
    %30 = vector.broadcast %28 : vector<1x128xf32> to vector<32x128xf32>
    %31 = arith.mulf %30, %25 : vector<32x128xf32>
    %32 = vector.broadcast %29 : vector<1x128xf32> to vector<32x128xf32>
    %33 = arith.mulf %32, %27 : vector<32x128xf32>
    %34 = arith.addf %31, %33 : vector<32x128xf32>
    %c96 = arith.constant 96 : index
    %c0_10 = arith.constant 0 : index
    %35 = vector.load %arg3[%c96, %c0_10] : memref<136x32xf32, #tpu.memory_space<vmem>>, vector<32x32xf32>
    %cst_11 = arith.constant dense<0.000000e+00> : vector<32x128xf32>
    %36 = tpu.matmul %35, %34, %cst_11 {dimension_numbers = #tpu.dot_dimension_numbers<[1], [0], [0], [1], [0, 0, 1, 1], [], []>} : vector<32x32xf32>, vector<32x128xf32>, vector<32x128xf32> -> vector<32x128xf32>
    %37 = arith.mulf %36, %36 : vector<32x128xf32>
    %c128 = arith.constant 128 : index
    %c0_12 = arith.constant 0 : index
    %38 = vector.load %arg3[%c128, %c0_12] : memref<136x32xf32, #tpu.memory_space<vmem>>, vector<4x32xf32>
    %cst_13 = arith.constant dense<0.000000e+00> : vector<4x128xf32>
    %39 = tpu.matmul %38, %37, %cst_13 {dimension_numbers = #tpu.dot_dimension_numbers<[1], [0], [0], [1], [0, 0, 1, 1], [], []>} : vector<4x32xf32>, vector<32x128xf32>, vector<4x128xf32> -> vector<4x128xf32>
    %c0_14 = arith.constant 0 : index
    %c0_15 = arith.constant 0 : index
    %40 = vector.load %arg4[%c0_14, %c0_15] : memref<4x128xf32, #tpu.memory_space<vmem>>, vector<4x128xf32>
    tpu.vector_store %arg4[%c0_14, %c0_15], %39 {strides = array<i32>} : memref<4x128xf32, #tpu.memory_space<vmem>>, vector<4x128xf32>,
    return
  }
  func.func @transform_0(%arg0: i32) -> (i32, i32) {
    %c0_i32 = arith.constant 0 : i32
    %c0_i32_0 = arith.constant 0 : i32
    return %c0_i32, %arg0 : i32, i32
  }
  func.func @transform_1(%arg0: i32) -> (i32, i32) {
    %c0_i32 = arith.constant 0 : i32
    %c0_i32_0 = arith.constant 0 : i32
    %c0_i32_1 = arith.constant 0 : i32
    return %c0_i32, %c0_i32_0 : i32, i32
  }
  func.func @transform_2(%arg0: i32) -> (i32, i32) {
    %c0_i32 = arith.constant 0 : i32
    %c0_i32_0 = arith.constant 0 : i32
    %c0_i32_1 = arith.constant 0 : i32
    return %c0_i32, %c0_i32_0 : i32, i32
  }
  func.func @transform_3(%arg0: i32) -> (i32, i32) {
    %c0_i32 = arith.constant 0 : i32
    %c0_i32_0 = arith.constant 0 : i32
    return %c0_i32, %arg0 : i32, i32
  }
}

</mosaic_0001>

<llo_original>
// kernel: tpu_custom_call.1
$region0: #{tpu_custom_call.1}
  #allocation0 [shape = 'u32[]', space=smem, size = 0x4, offset = 0x4, fixed_abs, tag = 'smem constant byte address 0x4 - core index']
  #allocation1 [shape = 'u32[144,128]{1,0:T(1,128)}', space=vmem, size = 0x12000, scoped, tag = 'internal scratch']
  %s0 = inlined_call_operand.vmem [shape: f32[3,128], index: 0, kind: input, shape index: {}]
  %s1 = inlined_call_operand.vmem [shape: f32[32,1], index: 1, kind: input, shape index: {}]
  %s2 = inlined_call_operand.vmem [shape: f32[136,32], index: 2, kind: input, shape index: {}]
  %s3 = inlined_call_operand.hbm [shape: f32[4,128], index: 3, kind: output, shape index: {}]
  %s4 = sld [smem:[#allocation0]]
  $region22: #{tpu_custom_call.1} parent=0
    _
  %s6 = ssub.s32 1, %s4
  %s7 = scalar_select 0, %s6, %s4
  $region1: #{tpu_custom_call.1} parent=0
    #allocation2 [shape = 'u8[2048]{0}', space=vmem, size = 0x800, scoped, tag = 'output window, operand 0, single buffered']
    #allocation3 [shape = 's32[1]{0}', space=sflag, size = 0x4, scoped, tag = 'scoped memory for tpu_custom_call.1']
    %8 = vsyncpa [#allocation3], 0
    // Predicated region
    $region2: #{tpu_custom_call.1} parent=1 // pred_check
      _
    $region3: #{tpu_custom_call.1} parent=1 // pred_check_branch
      %10 = sbr.rel (0) target = $region5
    $region4: #{tpu_custom_call.1} parent=1 // pred_region
      _
    $region5: #{tpu_custom_call.1} parent=1 // pred_fallthru
      _
    // Predicated region
    $region6: #{tpu_custom_call.1} parent=1 // pred_check
      _
    $region7: #{tpu_custom_call.1} parent=1 // pred_check_branch
      %12 = sbr.rel (0) target = $region9
    $region8: #{tpu_custom_call.1} parent=1 // pred_region
      _
    $region9: #{tpu_custom_call.1} parent=1 // pred_fallthru
      _
    // Predicated region
    $region10: #{tpu_custom_call.1} parent=1 // pred_check
      _
    $region11: #{tpu_custom_call.1} parent=1 // pred_check_branch
      %14 = sbr.rel (0) target = $region13
    $region12: #{tpu_custom_call.1} parent=1 // pred_region
      _
    $region13: #{tpu_custom_call.1} parent=1 // pred_fallthru
      _
    %v15 = vld [vmem:[%s0] sm:$0x7]
    %v16 = vmul.f32 %v15, 0.5
    %v17 = vand.u32 2147483647, %v16
    %vm18 = vcmp.le.f32.partialorder %v17, 0.7853982
    %vm19 = vcmp.lt.s32.totalorder %v16, 0
    %v20 = vand.u32 %v16, 2139095040
    %v21 = vshrl.u32 %v20, 23
    %v22 = vsub.s32 %v21, 127
    %v23 = vand.u32 2147483647, %v16
    %v24 = vand.u32 %v23, 8388607
    %v25 = vor.u32 %v24, 8388608
    %v26 = vsub.s32 0, %v25
    %v27 = vadd.s32 %v22, 1
    %vm28 = vcmp.gt.s32.totalorder %v27, 0
    %v29 = vsel %vm28, %v27, 0
    %v30 = vshrl.u32 %v29, 5
    %v31 = vand.u32 %v29, 31
    %v32 = vsub.s32 32, %v31
    %v33 = vshrl.u32 683565275, %v32
    %v34 = vshll.u32 683565275, %v31
    %v35 = vshrl.u32 2475754826, %v32
    %v36 = vor.u32 %v34, %v35
    %v37 = vshll.u32 2475754826, %v31
    %v38 = vshrl.u32 2131351028, %v32
    %v39 = vor.u32 %v37, %v38
    %v40 = vshll.u32 2131351028, %v31
    %v41 = vshrl.u32 2102212464, %v32
    %v42 = vor.u32 %v40, %v41
    %v43 = vshll.u32 2102212464, %v31
    %v44 = vshrl.u32 920167782, %v32
    %v45 = vor.u32 %v43, %v44
    %v46 = vshll.u32 920167782, %v31
    %v47 = vshrl.u32 1326507024, %v32
    %v48 = vor.u32 %v46, %v47
    %vm49 = vcmp.lt.s32.totalorder %v30, 1
    %vm50 = vcmp.lt.s32.totalorder %v30, 2
    %vm51 = vcmp.lt.s32.totalorder %v30, 3
    %vm52 = vcmp.lt.s32.totalorder %v30, 4
    %v53 = vsel %vm49, %v33, %v36
    %v54 = vsel %vm52, %v42, 2102212464
    %v55 = vsel %vm51, %v39, %v54
    %v56 = vsel %vm50, %v53, %v55
    %v57 = vsel %vm49, %v36, %v39
    %v58 = vsel %vm52, %v45, 920167782
    %v59 = vsel %vm51, %v42, %v58
    %v60 = vsel %vm50, %v57, %v59
    %v61 = vsel %vm49, %v39, %v42
    %v62 = vsel %vm52, %v48, 1326507024
    %v63 = vsel %vm51, %v45, %v62
    %v64 = vsel %vm50, %v61, %v63
    %v65 = vshll.u32 %v25, 8
    %v66 = vmul.u32.u64.compose %v65, %v64
    %v67 = vextract.low.u32 %v66
    %v68 = vextract.high.u32 %v66
    %v69 = vmul.u32.u64.compose %v65, %v60
    %v70 = vextract.low.u32 %v69
    %v71 = vextract.high.u32 %v69
    %v72 = vmul.u32 %v65, %v56
    %v73 = vadd.s32 %v68, %v70
    %vm74 = vc.u32 %v68, %v70
    %v75 = vadd.s32 %v71, 1
    %v76 = vsel %vm74, %v75, %v71
    %v77 = vadd.s32 %v72, %v76
    %v78 = vadd.s32 %v77, 536870912
    %v79 = vshrl.u32 %v78, 30
    %v80 = vshll.u32 %v79, 30
    %v81 = vsub.s32 %v77, %v80
    %vm82 = vcmp.lt.s32.totalorder %v81, 0
    %v83 = vsub.s32 0, %v81
    %v84 = vsel %vm82, %v83, %v81
    %v85 = vclz %v84
    %v86 = vsub.s32 %v85, 2
    %vm87 = vcmp.gt.s32.totalorder 0, %v86
    %v88 = vsel %vm87, 0, %v86
    %v89 = vsub.s32 32, %v88
    %v90 = vshll.u32 %v81, %v88
    %v91 = vshrl.u32 %v73, %v89
    %v92 = vor.u32 %v90, %v91
    %v93 = vsub.s32 4294967266, %v88
    %v94 = vadd.s32 %v93, 127
    %v95 = vshll.u32 %v94, 23
    %v96 = vor.u32 4788187, %v95
    %v97 = vand.u32 2147483647, %v96
    %v99 = vcvt.s32.f32 %v92
    %v100 = vmul.f32 %v99, %v97
    %v101 = vxor.u32 %v100, 2147483648
    %v102 = vsel %vm19, %v101, %v100
    %v103 = vsub.s32 4, %v79
    %v104 = vsel %vm19, %v103, %v79
    %v105 = vsel %vm18, %v16, %v102
    %v106 = vsel %vm18, 0, %v104
    %v107 = vcosq.f32.pop %v105
    %v108 = vsinq.f32.pop %v105
    %vm109 = vweird.f32 %v16
    %v110 = vand.u32 %v106, 3
    %vm111 = vcmp.lt.s32.totalorder %v110, 2
    %vm112 = vcmp.eq.s32.totalorder %v110, 0
    %v113 = vxor.u32 %v108, 2147483648
    %v114 = vsel %vm112, %v107, %v113
    %vm115 = vcmp.eq.s32.totalorder %v110, 2
    %v116 = vxor.u32 %v107, 2147483648
    %v117 = vsel %vm115, %v116, %v108
    %v118 = vsel %vm111, %v114, %v117
    %v119 = vsel %vm109, nan, %v118
    %v120 = vand.u32 2147483647, %v16
    %vm121 = vcmp.le.f32.partialorder %v120, 0.7853982
    %vm122 = vcmp.lt.s32.totalorder %v16, 0
    %v123 = vand.u32 %v16, 2139095040
    %v124 = vshrl.u32 %v123, 23
    %v125 = vsub.s32 %v124, 127
    %v126 = vand.u32 2147483647, %v16
    %v127 = vand.u32 %v126, 8388607
    %v128 = vor.u32 %v127, 8388608
    %v129 = vsub.s32 0, %v128
    %v130 = vadd.s32 %v125, 1
    %vm131 = vcmp.gt.s32.totalorder %v130, 0
    %v132 = vsel %vm131, %v130, 0
    %v133 = vshrl.u32 %v132, 5
    %v134 = vand.u32 %v132, 31
    %v135 = vsub.s32 32, %v134
    %v136 = vshrl.u32 683565275, %v135
    %v137 = vshll.u32 683565275, %v134
    %v138 = vshrl.u32 2475754826, %v135
    %v139 = vor.u32 %v137, %v138
    %v140 = vshll.u32 2475754826, %v134
    %v141 = vshrl.u32 2131351028, %v135
    %v142 = vor.u32 %v140, %v141
    %v143 = vshll.u32 2131351028, %v134
    %v144 = vshrl.u32 2102212464, %v135
    %v145 = vor.u32 %v143, %v144
    %v146 = vshll.u32 2102212464, %v134
    %v147 = vshrl.u32 920167782, %v135
    %v148 = vor.u32 %v146, %v147
    %v149 = vshll.u32 920167782, %v134
    %v150 = vshrl.u32 1326507024, %v135
    %v151 = vor.u32 %v149, %v150
    %vm152 = vcmp.lt.s32.totalorder %v133, 1
    %vm153 = vcmp.lt.s32.totalorder %v133, 2
    %vm154 = vcmp.lt.s32.totalorder %v133, 3
    %vm155 = vcmp.lt.s32.totalorder %v133, 4
    %v156 = vsel %vm152, %v136, %v139
    %v157 = vsel %vm155, %v145, 2102212464
    %v158 = vsel %vm154, %v142, %v157
    %v159 = vsel %vm153, %v156, %v158
    %v160 = vsel %vm152, %v139, %v142
    %v161 = vsel %vm155, %v148, 920167782
    %v162 = vsel %vm154, %v145, %v161
    %v163 = vsel %vm153, %v160, %v162
    %v164 = vsel %vm152, %v142, %v145
    %v165 = vsel %vm155, %v151, 1326507024
    %v166 = vsel %vm154, %v148, %v165
    %v167 = vsel %vm153, %v164, %v166
    %v168 = vshll.u32 %v128, 8
    %v169 = vmul.u32.u64.compose %v168, %v167
    %v170 = vextract.low.u32 %v169
    %v171 = vextract.high.u32 %v169
    %v172 = vmul.u32.u64.compose %v168, %v163
    %v173 = vextract.low.u32 %v172
    %v174 = vextract.high.u32 %v172
    %v175 = vmul.u32 %v168, %v159
    %v176 = vadd.s32 %v171, %v173
    %vm177 = vc.u32 %v171, %v173
    %v178 = vadd.s32 %v174, 1
    %v179 = vsel %vm177, %v178, %v174
    %v180 = vadd.s32 %v175, %v179
    %v181 = vadd.s32 %v180, 536870912
    %v182 = vshrl.u32 %v181, 30
    %v183 = vshll.u32 %v182, 30
    %v184 = vsub.s32 %v180, %v183
    %vm185 = vcmp.lt.s32.totalorder %v184, 0
    %v186 = vsub.s32 0, %v184
    %v187 = vsel %vm185, %v186, %v184
    %v188 = vclz %v187
    %v189 = vsub.s32 %v188, 2
    %vm190 = vcmp.gt.s32.totalorder 0, %v189
    %v191 = vsel %vm190, 0, %v189
    %v192 = vsub.s32 32, %v191
    %v193 = vshll.u32 %v184, %v191
    %v194 = vshrl.u32 %v176, %v192
    %v195 = vor.u32 %v193, %v194
    %v196 = vsub.s32 4294967266, %v191
    %v197 = vadd.s32 %v196, 127
    %v198 = vshll.u32 %v197, 23
    %v199 = vor.u32 4788187, %v198
    %v200 = vand.u32 2147483647, %v199
    %v202 = vcvt.s32.f32 %v195
    %v203 = vmul.f32 %v202, %v200
    %v204 = vxor.u32 %v203, 2147483648
    %v205 = vsel %vm122, %v204, %v203
    %v206 = vsub.s32 4, %v182
    %v207 = vsel %vm122, %v206, %v182
    %v208 = vsel %vm121, %v16, %v205
    %v209 = vsel %vm121, 0, %v207
    %v210 = vcosq.f32.pop %v208
    %v211 = vsinq.f32.pop %v208
    %vm212 = vweird.f32 %v16
    %v213 = vadd.s32 %v209, 3
    %v214 = vand.u32 %v213, 3
    %vm215 = vcmp.lt.s32.totalorder %v214, 2
    %vm216 = vcmp.eq.s32.totalorder %v214, 0
    %v217 = vxor.u32 %v211, 2147483648
    %v218 = vsel %vm216, %v210, %v217
    %vm219 = vcmp.eq.s32.totalorder %v214, 2
    %v220 = vxor.u32 %v210, 2147483648
    %v221 = vsel %vm219, %v220, %v211
    %v222 = vsel %vm215, %v218, %v221
    %v223 = vsel %vm212, nan, %v222
    %v224 = vld [vmem:[%s1] sm:$0xff]
    %v225 = vld [vmem:[%s1 + $0x8] sm:$0xff]
    %v226 = vld [vmem:[%s1 + $0x10] sm:$0xff]
    %v227 = vld [vmem:[%s1 + $0x18] sm:$0xff]
    %229 = vset.pattern.permute.xlu0 0
    %230 = vperm.xlu0 %229, %v224
    %v231 = vpop.permute.xlu0 %230
    %234 = vset.pattern.permute.xlu0 0
    %235 = vperm.xlu0 %234, %v225
    %v236 = vpop.permute.xlu0 %235
    %239 = vset.pattern.permute.xlu0 0
    %240 = vperm.xlu0 %239, %v226
    %v241 = vpop.permute.xlu0 %240
    %244 = vset.pattern.permute.xlu0 0
    %245 = vperm.xlu0 %244, %v227
    %v246 = vpop.permute.xlu0 %245
    %v248 = vld [vmem:[%s2] sm:$0xff]
    %v249 = vld [vmem:[%s2 + $0x8] sm:$0xff]
    %v250 = vld [vmem:[%s2 + $0x10] sm:$0xff]
    %v251 = vld [vmem:[%s2 + $0x18] sm:$0xff]
    %vm252 = vcmask 261120
    %v254 = vsel %vm252, %v248, 0
    %v257 = vsel %vm252, %v249, 0
    %v260 = vsel %vm252, %v250, 0
    %v263 = vsel %vm252, %v251, 0
    %265 = vmatprep.subr.mxu0 0.0
    %266 = vmatpush1.msra.mxu0 0.0
    %267 = vmatprep.subr.mxu0 0.0
    %268 = vmatpush1.msra.mxu0 0.0
    %269 = vmatprep.subr.mxu0 0.0
    %270 = vmatpush1.msra.mxu0 0.0
    %271 = vmatprep.subr.mxu0 0.0
    %272 = vmatpush1.msra.mxu0 0.0
    %273 = vmatprep.subr.mxu0 0.0
    %274 = vmatpush1.msra.mxu0 0.0
    %275 = vmatprep.subr.mxu0 0.0
    %276 = vmatpush1.msra.mxu0 0.0
    %277 = vmatprep.subr.mxu0 0.0
    %278 = vmatpush1.msra.mxu0 0.0
    %279 = vmatprep.subr.mxu0 0.0
    %280 = vmatpush1.msra.mxu0 0.0
    %281 = vmatprep.subr.mxu0 0.0
    %282 = vmatpush1.msra.mxu0 0.0
    %283 = vmatprep.subr.mxu0 0.0
    %284 = vmatpush1.msra.mxu0 0.0
    %285 = vmatprep.subr.mxu0 0.0
    %286 = vmatpush1.msra.mxu0 0.0
    %287 = vmatprep.subr.mxu0 0.0
    %288 = vmatpush1.msra.mxu0 0.0
    %289 = vmatprep.subr.mxu0 0.0
    %290 = vmatpush1.msra.mxu0 %v246
    %291 = vmatprep.subr.mxu0 0.0
    %292 = vmatpush1.msra.mxu0 %v241
    %293 = vmatprep.subr.mxu0 0.0
    %294 = vmatpush1.msra.mxu0 %v236
    %295 = vmatprep.subr.mxu0 0.0
    %296 = vmatpush1.msra.mxu0 %v231
    %297 = vmatprep.subr.mxu0 0.0
    %298 = vmatpush2.msra.mxu0 0.0
    %299 = vmatprep.subr.mxu0 0.0
    %300 = vmatpush2.msra.mxu0 0.0
    %301 = vmatprep.subr.mxu0 0.0
    %302 = vmatpush2.msra.mxu0 0.0
    %303 = vmatprep.subr.mxu0 0.0
    %304 = vmatpush2.msra.mxu0 0.0
    %305 = vmatprep.subr.mxu0 0.0
    %306 = vmatpush2.msra.mxu0 0.0
    %307 = vmatprep.subr.mxu0 0.0
    %308 = vmatpush2.msra.mxu0 0.0
    %309 = vmatprep.subr.mxu0 0.0
    %310 = vmatpush2.msra.mxu0 0.0
    %311 = vmatprep.subr.mxu0 0.0
    %312 = vmatpush2.msra.mxu0 0.0
    %313 = vmatprep.subr.mxu0 0.0
    %314 = vmatpush2.msra.mxu0 0.0
    %315 = vmatprep.subr.mxu0 0.0
    %316 = vmatpush2.msra.mxu0 0.0
    %317 = vmatprep.subr.mxu0 0.0
    %318 = vmatpush2.msra.mxu0 0.0
    %319 = vmatprep.subr.mxu0 0.0
    %320 = vmatpush2.msra.mxu0 0.0
    %321 = vmatprep.subr.mxu0 0.0
    %322 = vmatpush2.msra.mxu0 0.0
    %323 = vmatprep.subr.mxu0 0.0
    %324 = vmatpush2.msra.mxu0 0.0
    %325 = vmatprep.subr.mxu0 0.0
    %326 = vmatpush2.msra.mxu0 0.0
    %327 = vmatprep.subr.mxu0 0.0
    %328 = vmatpush2.msra.mxu0 0.0
    %329 = vmatprep.mubr.f32.mxu0 0.0
    %330 = vmatmul.mubr.f32.gmra.mxu0 %v254
    %v331 = vpop.f32.mrf.mxu0
    %v332 = vadd.f32 0.0, %v331
    %v333 = vpop.f32.mrf.mxu0
    %334 = vmatprep.mubr.f32.mxu0 0.0
    %335 = vmatmul.mubr.f32.gmra.mxu0 %v257
    %v336 = vpop.f32.mrf.mxu0
    %v337 = vadd.f32 0.0, %v336
    %v338 = vpop.f32.mrf.mxu0
    %339 = vmatprep.mubr.f32.mxu0 0.0
    %340 = vmatmul.mubr.f32.gmra.mxu0 %v260
    %v341 = vpop.f32.mrf.mxu0
    %v342 = vadd.f32 0.0, %v341
    %v343 = vpop.f32.mrf.mxu0
    %344 = vmatprep.mubr.f32.mxu0 0.0
    %345 = vmatmul.mubr.f32.gmra.mxu0 %v263
    %v346 = vpop.f32.mrf.mxu0
    %v347 = vadd.f32 0.0, %v346
    %v348 = vpop.f32.mrf.mxu0
    %349 = vdwg.mxu0
    %v350 = vlaneseq
    %v351 = vshrl.u32 %v350, 7
    %v352 = vsub.s32 0, %v351
    %v353 = vrot.slane %v119, %v352
    %v354 = vmul.f32 %v353, %v231
    %v355 = vmul.f32 %v353, %v236
    %v356 = vmul.f32 %v353, %v241
    %v357 = vmul.f32 %v353, %v246
    %v358 = vlaneseq
    %v359 = vshrl.u32 %v358, 7
    %v360 = vsub.s32 0, %v359
    %v361 = vrot.slane %v223, %v360
    %v362 = vmul.f32 %v361, %v332
    %v363 = vmul.f32 %v361, %v337
    %v364 = vmul.f32 %v361, %v342
    %v365 = vmul.f32 %v361, %v347
    %v366 = vadd.f32 %v354, %v362
    %v367 = vadd.f32 %v355, %v363
    %v368 = vadd.f32 %v356, %v364
    %v369 = vadd.f32 %v357, %v365
    %v370 = vld [vmem:[%s2 + $0x20] sm:$0xff]
    %v371 = vld [vmem:[%s2 + $0x28] sm:$0xff]
    %v372 = vld [vmem:[%s2 + $0x30] sm:$0xff]
    %v373 = vld [vmem:[%s2 + $0x38] sm:$0xff]
    %v375 = vsel %vm252, %v370, 0
    %v378 = vsel %vm252, %v371, 0
    %v381 = vsel %vm252, %v372, 0
    %v384 = vsel %vm252, %v373, 0
    %386 = vmatprep.subr.mxu0 0.0
    %387 = vmatpush1.msra.mxu0 0.0
    %388 = vmatprep.subr.mxu0 0.0
    %389 = vmatpush1.msra.mxu0 0.0
    %390 = vmatprep.subr.mxu0 0.0
    %391 = vmatpush1.msra.mxu0 0.0
    %392 = vmatprep.subr.mxu0 0.0
    %393 = vmatpush1.msra.mxu0 0.0
    %394 = vmatprep.subr.mxu0 0.0
    %395 = vmatpush1.msra.mxu0 0.0
    %396 = vmatprep.subr.mxu0 0.0
    %397 = vmatpush1.msra.mxu0 0.0
    %398 = vmatprep.subr.mxu0 0.0
    %399 = vmatpush1.msra.mxu0 0.0
    %400 = vmatprep.subr.mxu0 0.0
    %401 = vmatpush1.msra.mxu0 0.0
    %402 = vmatprep.subr.mxu0 0.0
    %403 = vmatpush1.msra.mxu0 0.0
    %404 = vmatprep.subr.mxu0 0.0
    %405 = vmatpush1.msra.mxu0 0.0
    %406 = vmatprep.subr.mxu0 0.0
    %407 = vmatpush1.msra.mxu0 0.0
    %408 = vmatprep.subr.mxu0 0.0
    %409 = vmatpush1.msra.mxu0 0.0
    %410 = vmatprep.subr.mxu0 0.0
    %411 = vmatpush1.msra.mxu0 %v369
    %412 = vmatprep.subr.mxu0 0.0
    %413 = vmatpush1.msra.mxu0 %v368
    %414 = vmatprep.subr.mxu0 0.0
    %415 = vmatpush1.msra.mxu0 %v367
    %416 = vmatprep.subr.mxu0 0.0
    %417 = vmatpush1.msra.mxu0 %v366
    %418 = vmatprep.subr.mxu0 0.0
    %419 = vmatpush2.msra.mxu0 0.0
    %420 = vmatprep.subr.mxu0 0.0
    %421 = vmatpush2.msra.mxu0 0.0
    %422 = vmatprep.subr.mxu0 0.0
    %423 = vmatpush2.msra.mxu0 0.0
    %424 = vmatprep.subr.mxu0 0.0
    %425 = vmatpush2.msra.mxu0 0.0
    %426 = vmatprep.subr.mxu0 0.0
    %427 = vmatpush2.msra.mxu0 0.0
    %428 = vmatprep.subr.mxu0 0.0
    %429 = vmatpush2.msra.mxu0 0.0
    %430 = vmatprep.subr.mxu0 0.0
    %431 = vmatpush2.msra.mxu0 0.0
    %432 = vmatprep.subr.mxu0 0.0
    %433 = vmatpush2.msra.mxu0 0.0
    %434 = vmatprep.subr.mxu0 0.0
    %435 = vmatpush2.msra.mxu0 0.0
    %436 = vmatprep.subr.mxu0 0.0
    %437 = vmatpush2.msra.mxu0 0.0
    %438 = vmatprep.subr.mxu0 0.0
    %439 = vmatpush2.msra.mxu0 0.0
    %440 = vmatprep.subr.mxu0 0.0
    %441 = vmatpush2.msra.mxu0 0.0
    %442 = vmatprep.subr.mxu0 0.0
    %443 = vmatpush2.msra.mxu0 0.0
    %444 = vmatprep.subr.mxu0 0.0
    %445 = vmatpush2.msra.mxu0 0.0
    %446 = vmatprep.subr.mxu0 0.0
    %447 = vmatpush2.msra.mxu0 0.0
    %448 = vmatprep.subr.mxu0 0.0
    %449 = vmatpush2.msra.mxu0 0.0
    %450 = vmatprep.mubr.f32.mxu0 0.0
    %451 = vmatmul.mubr.f32.gmra.mxu0 %v375
    %v452 = vpop.f32.mrf.mxu0
    %v453 = vadd.f32 0.0, %v452
    %v454 = vpop.f32.mrf.mxu0
    %455 = vmatprep.mubr.f32.mxu0 0.0
    %456 = vmatmul.mubr.f32.gmra.mxu0 %v378
    %v457 = vpop.f32.mrf.mxu0
    %v458 = vadd.f32 0.0, %v457
    %v459 = vpop.f32.mrf.mxu0
    %460 = vmatprep.mubr.f32.mxu0 0.0
    %461 = vmatmul.mubr.f32.gmra.mxu0 %v381
    %v462 = vpop.f32.mrf.mxu0
    %v463 = vadd.f32 0.0, %v462
    %v464 = vpop.f32.mrf.mxu0
    %465 = vmatprep.mubr.f32.mxu0 0.0
    %466 = vmatmul.mubr.f32.gmra.mxu0 %v384
    %v467 = vpop.f32.mrf.mxu0
    %v468 = vadd.f32 0.0, %v467
    %v469 = vpop.f32.mrf.mxu0
    %470 = vdwg.mxu0
    %v471 = vlaneseq
    %v472 = vshrl.u32 %v471, 7
    %v473 = vsub.s32 1, %v472
    %v474 = vrot.slane %v119, %v473
    %v475 = vmul.f32 %v474, %v366
    %v476 = vmul.f32 %v474, %v367
    %v477 = vmul.f32 %v474, %v368
    %v478 = vmul.f32 %v474, %v369
    %v479 = vlaneseq
    %v480 = vshrl.u32 %v479, 7
    %v481 = vsub.s32 1, %v480
    %v482 = vrot.slane %v223, %v481
    %v483 = vmul.f32 %v482, %v453
    %v484 = vmul.f32 %v482, %v458
    %v485 = vmul.f32 %v482, %v463
    %v486 = vmul.f32 %v482, %v468
    %v487 = vadd.f32 %v475, %v483
    %v488 = vadd.f32 %v476, %v484
    %v489 = vadd.f32 %v477, %v485
    %v490 = vadd.f32 %v478, %v486
    %v491 = vld [vmem:[%s2 + $0x40] sm:$0xff]
    %v492 = vld [vmem:[%s2 + $0x48] sm:$0xff]
    %v493 = vld [vmem:[%s2 + $0x50] sm:$0xff]
    %v494 = vld [vmem:[%s2 + $0x58] sm:$0xff]
    %v496 = vsel %vm252, %v491, 0
    %v499 = vsel %vm252, %v492, 0
    %v502 = vsel %vm252, %v493, 0
    %v505 = vsel %vm252, %v494, 0
    %507 = vmatprep.subr.mxu0 0.0
    %508 = vmatpush1.msra.mxu0 0.0
    %509 = vmatprep.subr.mxu0 0.0
    %510 = vmatpush1.msra.mxu0 0.0
    %511 = vmatprep.subr.mxu0 0.0
    %512 = vmatpush1.msra.mxu0 0.0
    %513 = vmatprep.subr.mxu0 0.0
    %514 = vmatpush1.msra.mxu0 0.0
    %515 = vmatprep.subr.mxu0 0.0
    %516 = vmatpush1.msra.mxu0 0.0
    %517 = vmatprep.subr.mxu0 0.0
    %518 = vmatpush1.msra.mxu0 0.0
    %519 = vmatprep.subr.mxu0 0.0
    %520 = vmatpush1.msra.mxu0 0.0
    %521 = vmatprep.subr.mxu0 0.0
    %522 = vmatpush1.msra.mxu0 0.0
    %523 = vmatprep.subr.mxu0 0.0
    %524 = vmatpush1.msra.mxu0 0.0
    %525 = vmatprep.subr.mxu0 0.0
    %526 = vmatpush1.msra.mxu0 0.0
    %527 = vmatprep.subr.mxu0 0.0
    %528 = vmatpush1.msra.mxu0 0.0
    %529 = vmatprep.subr.mxu0 0.0
    %530 = vmatpush1.msra.mxu0 0.0
    %531 = vmatprep.subr.mxu0 0.0
    %532 = vmatpush1.msra.mxu0 %v490
    %533 = vmatprep.subr.mxu0 0.0
    %534 = vmatpush1.msra.mxu0 %v489
    %535 = vmatprep.subr.mxu0 0.0
    %536 = vmatpush1.msra.mxu0 %v488
    %537 = vmatprep.subr.mxu0 0.0
    %538 = vmatpush1.msra.mxu0 %v487
    %539 = vmatprep.subr.mxu0 0.0
    %540 = vmatpush2.msra.mxu0 0.0
    %541 = vmatprep.subr.mxu0 0.0
    %542 = vmatpush2.msra.mxu0 0.0
    %543 = vmatprep.subr.mxu0 0.0
    %544 = vmatpush2.msra.mxu0 0.0
    %545 = vmatprep.subr.mxu0 0.0
    %546 = vmatpush2.msra.mxu0 0.0
    %547 = vmatprep.subr.mxu0 0.0
    %548 = vmatpush2.msra.mxu0 0.0
    %549 = vmatprep.subr.mxu0 0.0
    %550 = vmatpush2.msra.mxu0 0.0
    %551 = vmatprep.subr.mxu0 0.0
    %552 = vmatpush2.msra.mxu0 0.0
    %553 = vmatprep.subr.mxu0 0.0
    %554 = vmatpush2.msra.mxu0 0.0
    %555 = vmatprep.subr.mxu0 0.0
    %556 = vmatpush2.msra.mxu0 0.0
    %557 = vmatprep.subr.mxu0 0.0
    %558 = vmatpush2.msra.mxu0 0.0
    %559 = vmatprep.subr.mxu0 0.0
    %560 = vmatpush2.msra.mxu0 0.0
    %561 = vmatprep.subr.mxu0 0.0
    %562 = vmatpush2.msra.mxu0 0.0
    %563 = vmatprep.subr.mxu0 0.0
    %564 = vmatpush2.msra.mxu0 0.0
    %565 = vmatprep.subr.mxu0 0.0
    %566 = vmatpush2.msra.mxu0 0.0
    %567 = vmatprep.subr.mxu0 0.0
    %568 = vmatpush2.msra.mxu0 0.0
    %569 = vmatprep.subr.mxu0 0.0
    %570 = vmatpush2.msra.mxu0 0.0
    %571 = vmatprep.mubr.f32.mxu0 0.0
    %572 = vmatmul.mubr.f32.gmra.mxu0 %v496
    %v573 = vpop.f32.mrf.mxu0
    %v574 = vadd.f32 0.0, %v573
    %v575 = vpop.f32.mrf.mxu0
    %576 = vmatprep.mubr.f32.mxu0 0.0
    %577 = vmatmul.mubr.f32.gmra.mxu0 %v499
    %v578 = vpop.f32.mrf.mxu0
    %v579 = vadd.f32 0.0, %v578
    %v580 = vpop.f32.mrf.mxu0
    %581 = vmatprep.mubr.f32.mxu0 0.0
    %582 = vmatmul.mubr.f32.gmra.mxu0 %v502
    %v583 = vpop.f32.mrf.mxu0
    %v584 = vadd.f32 0.0, %v583
    %v585 = vpop.f32.mrf.mxu0
    %586 = vmatprep.mubr.f32.mxu0 0.0
    %587 = vmatmul.mubr.f32.gmra.mxu0 %v505
    %v588 = vpop.f32.mrf.mxu0
    %v589 = vadd.f32 0.0, %v588
    %v590 = vpop.f32.mrf.mxu0
    %591 = vdwg.mxu0
    %v592 = vlaneseq
    %v593 = vshrl.u32 %v592, 7
    %v594 = vsub.s32 2, %v593
    %v595 = vrot.slane %v119, %v594
    %v596 = vmul.f32 %v595, %v487
    %v597 = vmul.f32 %v595, %v488
    %v598 = vmul.f32 %v595, %v489
    %v599 = vmul.f32 %v595, %v490
    %v600 = vlaneseq
    %v601 = vshrl.u32 %v600, 7
    %v602 = vsub.s32 2, %v601
    %v603 = vrot.slane %v223, %v602
    %v604 = vmul.f32 %v603, %v574
    %v605 = vmul.f32 %v603, %v579
    %v606 = vmul.f32 %v603, %v584
    %v607 = vmul.f32 %v603, %v589
    %v608 = vadd.f32 %v596, %v604
    %v609 = vadd.f32 %v597, %v605
    %v610 = vadd.f32 %v598, %v606
    %v611 = vadd.f32 %v599, %v607
    %v612 = vld [vmem:[%s2 + $0x60] sm:$0xff]
    %v613 = vld [vmem:[%s2 + $0x68] sm:$0xff]
    %v614 = vld [vmem:[%s2 + $0x70] sm:$0xff]
    %v615 = vld [vmem:[%s2 + $0x78] sm:$0xff]
    %v617 = vsel %vm252, %v612, 0
    %v620 = vsel %vm252, %v613, 0
    %v623 = vsel %vm252, %v614, 0
    %v626 = vsel %vm252, %v615, 0
    %628 = vmatprep.subr.mxu0 0.0
    %629 = vmatpush1.msra.mxu0 0.0
    %630 = vmatprep.subr.mxu0 0.0
    %631 = vmatpush1.msra.mxu0 0.0
    %632 = vmatprep.subr.mxu0 0.0
    %633 = vmatpush1.msra.mxu0 0.0
    %634 = vmatprep.subr.mxu0 0.0
    %635 = vmatpush1.msra.mxu0 0.0
    %636 = vmatprep.subr.mxu0 0.0
    %637 = vmatpush1.msra.mxu0 0.0
    %638 = vmatprep.subr.mxu0 0.0
    %639 = vmatpush1.msra.mxu0 0.0
    %640 = vmatprep.subr.mxu0 0.0
    %641 = vmatpush1.msra.mxu0 0.0
    %642 = vmatprep.subr.mxu0 0.0
    %643 = vmatpush1.msra.mxu0 0.0
    %644 = vmatprep.subr.mxu0 0.0
    %645 = vmatpush1.msra.mxu0 0.0
    %646 = vmatprep.subr.mxu0 0.0
    %647 = vmatpush1.msra.mxu0 0.0
    %648 = vmatprep.subr.mxu0 0.0
    %649 = vmatpush1.msra.mxu0 0.0
    %650 = vmatprep.subr.mxu0 0.0
    %651 = vmatpush1.msra.mxu0 0.0
    %652 = vmatprep.subr.mxu0 0.0
    %653 = vmatpush1.msra.mxu0 %v611
    %654 = vmatprep.subr.mxu0 0.0
    %655 = vmatpush1.msra.mxu0 %v610
    %656 = vmatprep.subr.mxu0 0.0
    %657 = vmatpush1.msra.mxu0 %v609
    %658 = vmatprep.subr.mxu0 0.0
    %659 = vmatpush1.msra.mxu0 %v608
    %660 = vmatprep.subr.mxu0 0.0
    %661 = vmatpush2.msra.mxu0 0.0
    %662 = vmatprep.subr.mxu0 0.0
    %663 = vmatpush2.msra.mxu0 0.0
    %664 = vmatprep.subr.mxu0 0.0
    %665 = vmatpush2.msra.mxu0 0.0
    %666 = vmatprep.subr.mxu0 0.0
    %667 = vmatpush2.msra.mxu0 0.0
    %668 = vmatprep.subr.mxu0 0.0
    %669 = vmatpush2.msra.mxu0 0.0
    %670 = vmatprep.subr.mxu0 0.0
    %671 = vmatpush2.msra.mxu0 0.0
    %672 = vmatprep.subr.mxu0 0.0
    %673 = vmatpush2.msra.mxu0 0.0
    %674 = vmatprep.subr.mxu0 0.0
    %675 = vmatpush2.msra.mxu0 0.0
    %676 = vmatprep.subr.mxu0 0.0
    %677 = vmatpush2.msra.mxu0 0.0
    %678 = vmatprep.subr.mxu0 0.0
    %679 = vmatpush2.msra.mxu0 0.0
    %680 = vmatprep.subr.mxu0 0.0
    %681 = vmatpush2.msra.mxu0 0.0
    %682 = vmatprep.subr.mxu0 0.0
    %683 = vmatpush2.msra.mxu0 0.0
    %684 = vmatprep.subr.mxu0 0.0
    %685 = vmatpush2.msra.mxu0 0.0
    %686 = vmatprep.subr.mxu0 0.0
    %687 = vmatpush2.msra.mxu0 0.0
    %688 = vmatprep.subr.mxu0 0.0
    %689 = vmatpush2.msra.mxu0 0.0
    %690 = vmatprep.subr.mxu0 0.0
    %691 = vmatpush2.msra.mxu0 0.0
    %692 = vmatprep.mubr.f32.mxu0 0.0
    %693 = vmatmul.mubr.f32.gmra.mxu0 %v617
    %v694 = vpop.f32.mrf.mxu0
    %v695 = vadd.f32 0.0, %v694
    %v696 = vpop.f32.mrf.mxu0
    %697 = vmatprep.mubr.f32.mxu0 0.0
    %698 = vmatmul.mubr.f32.gmra.mxu0 %v620
    %v699 = vpop.f32.mrf.mxu0
    %v700 = vadd.f32 0.0, %v699
    %v701 = vpop.f32.mrf.mxu0
    %702 = vmatprep.mubr.f32.mxu0 0.0
    %703 = vmatmul.mubr.f32.gmra.mxu0 %v623
    %v704 = vpop.f32.mrf.mxu0
    %v705 = vadd.f32 0.0, %v704
    %v706 = vpop.f32.mrf.mxu0
    %707 = vmatprep.mubr.f32.mxu0 0.0
    %708 = vmatmul.mubr.f32.gmra.mxu0 %v626
    %v709 = vpop.f32.mrf.mxu0
    %v710 = vadd.f32 0.0, %v709
    %v711 = vpop.f32.mrf.mxu0
    %712 = vdwg.mxu0
    %v713 = vmul.f32 %v695, %v695
    %v714 = vmul.f32 %v700, %v700
    %v715 = vmul.f32 %v705, %v705
    %v716 = vmul.f32 %v710, %v710
    %v717 = vld [vmem:[%s2 + $0x80] sm:$0xf]
    %v719 = vsel %vm252, %v717, 0
    %721 = vmatprep.subr.mxu0 0.0
    %722 = vmatpush1.msra.mxu0 0.0
    %723 = vmatprep.subr.mxu0 0.0
    %724 = vmatpush1.msra.mxu0 0.0
    %725 = vmatprep.subr.mxu0 0.0
    %726 = vmatpush1.msra.mxu0 0.0
    %727 = vmatprep.subr.mxu0 0.0
    %728 = vmatpush1.msra.mxu0 0.0
    %729 = vmatprep.subr.mxu0 0.0
    %730 = vmatpush1.msra.mxu0 0.0
    %731 = vmatprep.subr.mxu0 0.0
    %732 = vmatpush1.msra.mxu0 0.0
    %733 = vmatprep.subr.mxu0 0.0
    %734 = vmatpush1.msra.mxu0 0.0
    %735 = vmatprep.subr.mxu0 0.0
    %736 = vmatpush1.msra.mxu0 0.0
    %737 = vmatprep.subr.mxu0 0.0
    %738 = vmatpush1.msra.mxu0 0.0
    %739 = vmatprep.subr.mxu0 0.0
    %740 = vmatpush1.msra.mxu0 0.0
    %741 = vmatprep.subr.mxu0 0.0
    %742 = vmatpush1.msra.mxu0 0.0
    %743 = vmatprep.subr.mxu0 0.0
    %744 = vmatpush1.msra.mxu0 0.0
    %745 = vmatprep.subr.mxu0 0.0
    %746 = vmatpush1.msra.mxu0 %v716
    %747 = vmatprep.subr.mxu0 0.0
    %748 = vmatpush1.msra.mxu0 %v715
    %749 = vmatprep.subr.mxu0 0.0
    %750 = vmatpush1.msra.mxu0 %v714
    %751 = vmatprep.subr.mxu0 0.0
    %752 = vmatpush1.msra.mxu0 %v713
    %753 = vmatprep.subr.mxu0 0.0
    %754 = vmatpush2.msra.mxu0 0.0
    %755 = vmatprep.subr.mxu0 0.0
    %756 = vmatpush2.msra.mxu0 0.0
    %757 = vmatprep.subr.mxu0 0.0
    %758 = vmatpush2.msra.mxu0 0.0
    %759 = vmatprep.subr.mxu0 0.0
    %760 = vmatpush2.msra.mxu0 0.0
    %761 = vmatprep.subr.mxu0 0.0
    %762 = vmatpush2.msra.mxu0 0.0
    %763 = vmatprep.subr.mxu0 0.0
    %764 = vmatpush2.msra.mxu0 0.0
    %765 = vmatprep.subr.mxu0 0.0
    %766 = vmatpush2.msra.mxu0 0.0
    %767 = vmatprep.subr.mxu0 0.0
    %768 = vmatpush2.msra.mxu0 0.0
    %769 = vmatprep.subr.mxu0 0.0
    %770 = vmatpush2.msra.mxu0 0.0
    %771 = vmatprep.subr.mxu0 0.0
    %772 = vmatpush2.msra.mxu0 0.0
    %773 = vmatprep.subr.mxu0 0.0
    %774 = vmatpush2.msra.mxu0 0.0
    %775 = vmatprep.subr.mxu0 0.0
    %776 = vmatpush2.msra.mxu0 0.0
    %777 = vmatprep.subr.mxu0 0.0
    %778 = vmatpush2.msra.mxu0 0.0
    %779 = vmatprep.subr.mxu0 0.0
    %780 = vmatpush2.msra.mxu0 0.0
    %781 = vmatprep.subr.mxu0 0.0
    %782 = vmatpush2.msra.mxu0 0.0
    %783 = vmatprep.subr.mxu0 0.0
    %784 = vmatpush2.msra.mxu0 0.0
    %785 = vmatprep.mubr.f32.mxu0 0.0
    %786 = vmatmul.mubr.f32.gmra.mxu0 %v719
    %v787 = vpop.f32.mrf.mxu0
    %v788 = vadd.f32 0.0, %v787
    %v789 = vpop.f32.mrf.mxu0
    %790 = vdwg.mxu0
    %791 = vst [vmem:[#allocation2] sm:$0xf] %v788
    // Predicated region
    $region14: #{tpu_custom_call.1} parent=1 // pred_check
      _
    $region15: #{tpu_custom_call.1} parent=1 // pred_check_branch
      %793 = sbr.rel (0) target = $region17
    $region16: #{tpu_custom_call.1} parent=1 // pred_region
      %s795 = ssub.s32 64, 64
      %796 = vsyncadd [#allocation3], %s795
      %s798 = sshll.u32 [#allocation2], 4
      %s799 = int_to_ptr.vmem [resolvable:$true] %s798
      %801 = dma.vmem_to_hbm [thread:$0]  %s799, 64, %s3, [#allocation3]
    $region17: #{tpu_custom_call.1} parent=1 // pred_fallthru
      _
    // Predicated region
    $region18: #{tpu_custom_call.1} parent=1 // pred_check
      _
    $region19: #{tpu_custom_call.1} parent=1 // pred_check_branch
      %803 = sbr.rel (0) target = $region21
    $region20: #{tpu_custom_call.1} parent=1 // pred_region
      %804 = dma.done [#allocation3], 64
    $region21: #{tpu_custom_call.1} parent=1 // pred_fallthru
      _
    %805 = vsyncpa [#allocation3], 1

</llo_original>
